<compile_context>
chip_gen: v7x
topology: tpu7x:2x2x1
jax: 0.10.0
libtpu: 0.0.40
codegen_flags: <defaults>
</compile_context>

<pallas_src>
import functools

import jax
import jax.numpy as jnp
from jax import lax
from jax.experimental import pallas as pl
from jax.experimental.pallas import tpu as pltpu

_BIG = 1e30          # "+inf"-like sentinel for padded rows / columns (f32-safe).
_UNROLL_STRIPS = 4   # <= this many strips: unrolled Python loop (LLO visibility),
                     # otherwise a rolled fori_loop (bounds VMEM live ranges).


def _round_up(x, m):
    return ((x + m - 1) // m) * m


def _chamfer_kernel(x_ref, yt2_ref, yy_ref, d1_ref, d2_ref, xx_ref, rowmin_ref, *,
                    n_valid, tn, tm, strip, mask_rows):
    """One (batch, N-tile, M-tile) grid step.

    x_ref      : (1, TN, 3)   cloud-1 points, tile i
    yt2_ref    : (1, 3, TM)   -2 * cloud-2 points, coordinate-major, tile j
    yy_ref     : (1, 1, TM)   |y|^2 (padded columns already pushed to +BIG)
    d1_ref     : (1, 1, TN)   resident across j; written at j == last
    d2_ref     : (1, 1, TM)   per-(b, i, j) partial column mins (min over i in wrapper)
    xx_ref     : (TN, 1)      scratch: |x|^2 (+ row mask), computed at j == 0
    rowmin_ref : (TN, 128)    scratch: running per-row min folded over lane groups
    """
    i = pl.program_id(1)
    j = pl.program_id(2)
    nj = pl.num_programs(2)
    n_strips = tm // strip

    # Per-(b, i) invariants, hoisted out of the inner j loop.
    @pl.when(j == 0)
    def _():
        x0 = x_ref[0]                                           # (TN, 3)
        xx = jnp.sum(x0 * x0, axis=1, keepdims=True)            # (TN, 1)
        if mask_rows:
            row_ids = i * tn + lax.broadcasted_iota(jnp.int32, (tn, 1), 0)
            xx = jnp.where(row_ids < n_valid, xx, _BIG)
        xx_ref[...] = xx
        rowmin_ref[...] = jnp.full_like(rowmin_ref, _BIG)

    x = x_ref[0]                                                # (TN, 3)
    xx = xx_ref[...]                                            # (TN, 1)

    def strip_body(g, carry):
        off = g * strip
        if not isinstance(g, int):
            off = pl.multiple_of(off, strip)
        yt2_s = yt2_ref[0, :, pl.ds(off, strip)]                # (3, STRIP), already -2*y
        yy_s = yy_ref[0, :, pl.ds(off, strip)]                  # (1, STRIP), padded cols = +BIG

        # Cross term on the MXU (K = 3, lane-dense RHS); fully fused with the adds.
        d = jnp.dot(x, yt2_s, preferred_element_type=jnp.float32) + xx + yy_s  # (TN, STRIP)

        # dist2: sublane reduce -> lane-dense (1, STRIP); clamp only the reduction.
        col_min = jnp.maximum(jnp.min(d, axis=0, keepdims=True), 0.0)
        d2_ref[0, :, pl.ds(off, strip)] = col_min

        # dist1: fold 128-lane groups with VPU mins, accumulate in VMEM scratch.
        part = d[:, 0:128]
        for h in range(1, strip // 128):
            part = jnp.minimum(part, d[:, h * 128:(h + 1) * 128])
        rowmin_ref[...] = jnp.minimum(rowmin_ref[...], part)
        return carry

    if n_strips <= _UNROLL_STRIPS:
        for g in range(n_strips):
            strip_body(g, 0)
    else:
        lax.fori_loop(0, n_strips, strip_body, 0)

    # Finalize this (batch, i) row tile: one lane reduce + a tiny transpose so
    # the d1 store is lane-dense (N on the lane axis).
    @pl.when(j == nj - 1)
    def _():
        rmin = jnp.min(rowmin_ref[...], axis=1, keepdims=True)  # (TN, 1)
        d1_ref[0] = jnp.maximum(rmin, 0.0).T                    # (1, TN)


def chamfer_dists(xyz1, xyz2, *, tn=1024, tm=2048, strip=256):
    """Returns (dist1, dist2) with shapes (B, N) and (B, M), float32."""
    B, N, C = xyz1.shape
    B2, M, C2 = xyz2.shape
    assert B == B2 and C == 3 and C2 == 3
    assert strip % 128 == 0

    xyz1 = xyz1.astype(jnp.float32)
    xyz2 = xyz2.astype(jnp.float32)

    # Tile sizes: whole cloud if it fits one tile, else aligned tiles.
    if _round_up(N, 8) <= tn:
        TN = _round_up(N, 8)
    else:
        assert tn % 128 == 0, "tn must be a multiple of 128 when N is tiled"
        TN = tn
    if _round_up(M, strip) <= tm:
        TM = _round_up(M, strip)
    else:
        assert tm % strip == 0, "tm must be a multiple of strip when M is tiled"
        TM = tm

    N_pad = _round_up(N, TN)
    M_pad = _round_up(M, TM)
    n_i = N_pad // TN
    n_j = M_pad // TM

    x = jnp.pad(xyz1, ((0, 0), (0, N_pad - N), (0, 0))) if N_pad != N else xyz1
    y = jnp.pad(xyz2, ((0, 0), (0, M_pad - M), (0, 0))) if M_pad != M else xyz2

    # Precompute (once, in XLA): coordinate-major RHS with -2 folded in, and the
    # lane-dense |y|^2 row with padded columns masked out.
    yt2 = -2.0 * jnp.transpose(y, (0, 2, 1))                       # (B, 3, M_pad)
    y2 = jnp.sum(y * y, axis=-1)                                   # (B, M_pad)
    if M_pad != M:
        y2 = jnp.where(jnp.arange(M_pad)[None, :] < M, y2, _BIG)
    yy = y2[:, None, :]                                            # (B, 1, M_pad)

    kernel = functools.partial(
        _chamfer_kernel,
        n_valid=N, tn=TN, tm=TM, strip=strip, mask_rows=(N_pad != N))

    flops = B * N_pad * M_pad * (2 * 3 + 4)
    bytes_accessed = 4 * (B * N_pad * 3 + B * 4 * M_pad * n_i
                          + B * N_pad + B * n_i * M_pad)

    d1, d2p = pl.pallas_call(
        kernel,
        out_shape=(
            jax.ShapeDtypeStruct((B, 1, N_pad), jnp.float32),
            jax.ShapeDtypeStruct((B * n_i, 1, M_pad), jnp.float32),
        ),
        grid_spec=pltpu.PrefetchScalarGridSpec(
            num_scalar_prefetch=0,
            grid=(B, n_i, n_j),
            in_specs=[
                pl.BlockSpec((1, TN, 3), lambda b, i, j: (b, i, 0)),
                pl.BlockSpec((1, 3, TM), lambda b, i, j: (b, 0, j)),
                pl.BlockSpec((1, 1, TM), lambda b, i, j: (b, 0, j)),
            ],
            out_specs=[
                # d1: resident across j, one block per (b, i).
                pl.BlockSpec((1, 1, TN), lambda b, i, j: (b, 0, i)),
                # d2 partials: one lane-dense block per (b, i, j); no cross-i
                # read-modify-write, so b and i can both be megacore-parallel.
                pl.BlockSpec((1, 1, TM), lambda b, i, j, n_i=n_i: (b * n_i + i, 0, j)),
            ],
            scratch_shapes=[
                pltpu.VMEM((TN, 1), jnp.float32),      # |x|^2 (+ row mask)
                pltpu.VMEM((TN, 128), jnp.float32),    # running row min
            ],
        ),
        compiler_params=pltpu.CompilerParams(
            dimension_semantics=("parallel", "parallel", "arbitrary"),
            vmem_limit_bytes=32 * 1024 * 1024),
        cost_estimate=pl.CostEstimate(flops=flops, transcendentals=0,
                                      bytes_accessed=bytes_accessed),
    )(x, yt2, yy)

    dist1 = d1[:, 0, :N]
    dist2 = jnp.min(d2p.reshape(B, n_i, M_pad)[:, :, :M], axis=1)
    return dist1, dist2


def chamfer_distance_l2(xyz1, xyz2, ignore_zeros=False):
    """JAX equivalent of ChamferDistanceL2.forward (returns a scalar)."""
    batch_size = xyz1.shape[0]
    if batch_size == 1 and ignore_zeros:
        # Mirrors the PyTorch eager behaviour: drop points whose coordinate sum is 0.
        # TODO(synk): data-dependent shapes -> this path only works outside jit.
        nz1 = jnp.sum(xyz1, axis=2) != 0
        nz2 = jnp.sum(xyz2, axis=2) != 0
        xyz1 = xyz1[nz1][None]
        xyz2 = xyz2[nz2][None]
    dist1, dist2 = chamfer_dists(xyz1, xyz2)
    return jnp.mean(dist1) + jnp.mean(dist2)


def _reference(xyz1, xyz2):
    # Pure-JAX reference for sanity checking.
    diff = xyz1[:, :, None, :] - xyz2[:, None, :, :]          # (B, N, M, 3)
    d = jnp.sum(diff * diff, axis=-1)                         # (B, N, M)
    return jnp.mean(jnp.min(d, axis=2)) + jnp.mean(jnp.min(d, axis=1))


if __name__ == "__main__":
    key = jax.random.PRNGKey(0)
    k1, k2, k3, k4 = jax.random.split(key, 4)

    # Case 1: default tiles -> single (i, j) grid tile per batch, one strip.
    # Exercises column padding (M=224 -> M_pad=256) and lane-dense outputs.
    B, N, M = 2, 160, 224
    xyz1 = jax.random.normal(k1, (B, N, 3), dtype=jnp.float32)
    xyz2 = jax.random.normal(k2, (B, M, 3), dtype=jnp.float32)
    ref = _reference(xyz1, xyz2)
    out = jax.block_until_ready(chamfer_distance_l2(xyz1, xyz2))
    assert jnp.allclose(out, ref, rtol=1e-4, atol=1e-5), (out, ref)

    # Case 2: forced small tiles -> multiple i and j tiles, 2 strips per step
    # (unrolled path), row + column padding masks, per-i d2 partials reduced in
    # the wrapper, cross-j rowmin accumulation.
    B2, N2, M2 = 2, 300, 520
    a = jax.random.normal(k3, (B2, N2, 3), dtype=jnp.float32)
    b = jax.random.normal(k4, (B2, M2, 3), dtype=jnp.float32)
    ref2 = _reference(a, b)
    d1, d2 = chamfer_dists(a, b, tn=128, tm=256, strip=128)
    out2 = jax.block_until_ready(jnp.mean(d1) + jnp.mean(d2))
    assert jnp.allclose(out2, ref2, rtol=1e-4, atol=1e-5), (out2, ref2)

    # Case 3: many strips per grid step (5 > unroll threshold) -> exercises the
    # rolled fori_loop strip path with dynamic, aligned slices.
    d1, d2 = chamfer_dists(a, b, tn=128, tm=768, strip=128)
    out3 = jax.block_until_ready(jnp.mean(d1) + jnp.mean(d2))
    assert jnp.allclose(out3, ref2, rtol=1e-4, atol=1e-5), (out3, ref2)

    print("KERNEL_OK")
</pallas_src>

<mosaic_0001>
module attributes {stable_mosaic.version = 11 : i64} {
  func.func @_chamfer_kernel(%arg0: i32, %arg1: i32, %arg2: i32, %arg3: memref<1x160x3xf32, #tpu.memory_space<vmem>>, %arg4: memref<1x3x256xf32, #tpu.memory_space<vmem>>, %arg5: memref<1x1x256xf32, #tpu.memory_space<vmem>>, %arg6: memref<1x1x160xf32, #tpu.memory_space<vmem>>, %arg7: memref<1x1x256xf32, #tpu.memory_space<vmem>>, %arg8: memref<160x1xf32, #tpu.memory_space<vmem>>, %arg9: memref<160x128xf32, #tpu.memory_space<vmem>>) attributes {dimension_semantics = [#tpu.dimension_semantics<parallel>, #tpu.dimension_semantics<parallel>, #tpu.dimension_semantics<arbitrary>], iteration_bounds = array<i64: 2, 1, 1>, scalar_prefetch = 0 : i64, scratch_operands = 2 : i64, tpu.core_type = #tpu.core_type<tc>, window_params = [{transform_indices = @transform_0, window_bounds = array<i64: 1, 160, 3>}, {transform_indices = @transform_1, window_bounds = array<i64: 1, 3, 256>}, {transform_indices = @transform_2, window_bounds = array<i64: 1, 1, 256>}, {transform_indices = @transform_3, window_bounds = array<i64: 1, 1, 160>}, {transform_indices = @transform_4, window_bounds = array<i64: 1, 1, 256>}]} {
    %c0_i32 = arith.constant 0 : i32
    %0 = arith.cmpi eq, %arg2, %c0_i32 : i32
    %1 = arith.extui %0 : i1 to i32
    %c0_i32_0 = arith.constant 0 : i32
    %2 = arith.cmpi ne, %1, %c0_i32_0 : i32
    scf.if %2 {
      %c0_22 = arith.constant 0 : index
      %c0_23 = arith.constant 0 : index
      %c0_24 = arith.constant 0 : index
      %31 = vector.load %arg3[%c0_22, %c0_23, %c0_24] : memref<1x160x3xf32, #tpu.memory_space<vmem>>, vector<1x160x3xf32>
      %32 = vector.shape_cast %31 : vector<1x160x3xf32> to vector<160x3xf32>
      %33 = arith.mulf %32, %32 : vector<160x3xf32>
      %cst_25 = arith.constant dense<0.000000e+00> : vector<160xf32>
      %34 = vector.multi_reduction <add>, %33, %cst_25 [1] : vector<160x3xf32> to vector<160xf32>
      %35 = vector.shape_cast %34 : vector<160xf32> to vector<160x1xf32>
      %c0_26 = arith.constant 0 : index
      %c0_27 = arith.constant 0 : index
      %36 = vector.load %arg8[%c0_26, %c0_27] : memref<160x1xf32, #tpu.memory_space<vmem>>, vector<160x1xf32>
      tpu.vector_store %arg8[%c0_26, %c0_27], %35 {strides = array<i32>} : memref<160x1xf32, #tpu.memory_space<vmem>>, vector<160x1xf32>,
      %cst_28 = arith.constant 1.000000e+30 : f32
      %37 = vector.broadcast %cst_28 : f32 to vector<160x128xf32>
      %c0_29 = arith.constant 0 : index
      %c0_30 = arith.constant 0 : index
      %38 = vector.load %arg9[%c0_29, %c0_30] : memref<160x128xf32, #tpu.memory_space<vmem>>, vector<160x128xf32>
      tpu.vector_store %arg9[%c0_29, %c0_30], %37 {strides = array<i32>} : memref<160x128xf32, #tpu.memory_space<vmem>>, vector<160x128xf32>,
    } else {
    }
    %c0 = arith.constant 0 : index
    %c0_1 = arith.constant 0 : index
    %c0_2 = arith.constant 0 : index
    %3 = vector.load %arg3[%c0, %c0_1, %c0_2] : memref<1x160x3xf32, #tpu.memory_space<vmem>>, vector<1x160x3xf32>
    %4 = vector.shape_cast %3 : vector<1x160x3xf32> to vector<160x3xf32>
    %c0_3 = arith.constant 0 : index
    %c0_4 = arith.constant 0 : index
    %5 = vector.load %arg8[%c0_3, %c0_4] : memref<160x1xf32, #tpu.memory_space<vmem>>, vector<160x1xf32>
    %c0_5 = arith.constant 0 : index
    %c0_6 = arith.constant 0 : index
    %c0_7 = arith.constant 0 : index
    %6 = vector.load %arg4[%c0_5, %c0_6, %c0_7] : memref<1x3x256xf32, #tpu.memory_space<vmem>>, vector<1x3x256xf32>
    %7 = vector.shape_cast %6 : vector<1x3x256xf32> to vector<3x256xf32>
    %c0_8 = arith.constant 0 : index
    %c0_9 = arith.constant 0 : index
    %c0_10 = arith.constant 0 : index
    %8 = vector.load %arg5[%c0_8, %c0_9, %c0_10] : memref<1x1x256xf32, #tpu.memory_space<vmem>>, vector<1x1x256xf32>
    %9 = vector.shape_cast %8 : vector<1x1x256xf32> to vector<1x256xf32>
    %cst = arith.constant dense<0.000000e+00> : vector<160x256xf32>
    %10 = tpu.matmul %4, %7, %cst {dimension_numbers = #tpu.dot_dimension_numbers<[1], [0], [0], [1], [0, 0, 1, 1], [], []>} : vector<160x3xf32>, vector<3x256xf32>, vector<160x256xf32> -> vector<160x256xf32>
    %11 = vector.broadcast %5 : vector<160x1xf32> to vector<160x256xf32>
    %12 = arith.addf %10, %11 : vector<160x256xf32>
    %13 = vector.broadcast %9 : vector<1x256xf32> to vector<160x256xf32>
    %14 = arith.addf %12, %13 : vector<160x256xf32>
    %cst_11 = arith.constant dense<0x7F800000> : vector<256xf32>
    %15 = vector.multi_reduction <minimumf>, %14, %cst_11 [0] : vector<160x256xf32> to vector<256xf32>
    %16 = vector.shape_cast %15 : vector<256xf32> to vector<1x256xf32>
    %cst_12 = arith.constant 0.000000e+00 : f32
    %17 = vector.broadcast %cst_12 : f32 to vector<1x256xf32>
    %18 = arith.maximumf %16, %17 : vector<1x256xf32>
    %c0_13 = arith.constant 0 : index
    %c0_14 = arith.constant 0 : index
    %c0_15 = arith.constant 0 : index
    %19 = vector.load %arg7[%c0_13, %c0_14, %c0_15] : memref<1x1x256xf32, #tpu.memory_space<vmem>>, vector<1x1x256xf32>
    %20 = vector.shape_cast %19 : vector<1x1x256xf32> to vector<1x256xf32>
    %21 = vector.shape_cast %18 : vector<1x256xf32> to vector<1x1x256xf32>
    tpu.vector_store %arg7[%c0_13, %c0_14, %c0_15], %21 {strides = array<i32>} : memref<1x1x256xf32, #tpu.memory_space<vmem>>, vector<1x1x256xf32>,
    %22 = vector.extract_strided_slice %14 {offsets = [0, 0], sizes = [160, 128], strides = [1, 1]} : vector<160x256xf32> to vector<160x128xf32>
    %23 = vector.extract_strided_slice %14 {offsets = [0, 128], sizes = [160, 128], strides = [1, 1]} : vector<160x256xf32> to vector<160x128xf32>
    %24 = arith.minimumf %22, %23 : vector<160x128xf32>
    %c0_16 = arith.constant 0 : index
    %c0_17 = arith.constant 0 : index
    %25 = vector.load %arg9[%c0_16, %c0_17] : memref<160x128xf32, #tpu.memory_space<vmem>>, vector<160x128xf32>
    %26 = arith.minimumf %25, %24 : vector<160x128xf32>
    %c0_18 = arith.constant 0 : index
    %c0_19 = arith.constant 0 : index
    %27 = vector.load %arg9[%c0_18, %c0_19] : memref<160x128xf32, #tpu.memory_space<vmem>>, vector<160x128xf32>
    tpu.vector_store %arg9[%c0_18, %c0_19], %26 {strides = array<i32>} : memref<160x128xf32, #tpu.memory_space<vmem>>, vector<160x128xf32>,
    %c0_i32_20 = arith.constant 0 : i32
    %28 = arith.cmpi eq, %arg2, %c0_i32_20 : i32
    %29 = arith.extui %28 : i1 to i32
    %c0_i32_21 = arith.constant 0 : i32
    %30 = arith.cmpi ne, %29, %c0_i32_21 : i32
    scf.if %30 {
      %c0_22 = arith.constant 0 : index
      %c0_23 = arith.constant 0 : index
      %31 = vector.load %arg9[%c0_22, %c0_23] : memref<160x128xf32, #tpu.memory_space<vmem>>, vector<160x128xf32>
      %cst_24 = arith.constant dense<0x7F800000> : vector<160xf32>
      %32 = vector.multi_reduction <minimumf>, %31, %cst_24 [1] : vector<160x128xf32> to vector<160xf32>
      %33 = vector.shape_cast %32 : vector<160xf32> to vector<160x1xf32>
      %cst_25 = arith.constant 0.000000e+00 : f32
      %34 = vector.broadcast %cst_25 : f32 to vector<160x1xf32>
      %35 = arith.maximumf %33, %34 : vector<160x1xf32>
      %36 = tpu.transpose %35, [1, 0] : vector<160x1xf32> -> vector<1x160xf32>
      %c0_26 = arith.constant 0 : index
      %c0_27 = arith.constant 0 : index
      %c0_28 = arith.constant 0 : index
      %37 = vector.load %arg6[%c0_26, %c0_27, %c0_28] : memref<1x1x160xf32, #tpu.memory_space<vmem>>, vector<1x1x160xf32>
      %38 = vector.shape_cast %37 : vector<1x1x160xf32> to vector<1x160xf32>
      %39 = vector.shape_cast %36 : vector<1x160xf32> to vector<1x1x160xf32>
      tpu.vector_store %arg6[%c0_26, %c0_27, %c0_28], %39 {strides = array<i32>} : memref<1x1x160xf32, #tpu.memory_space<vmem>>, vector<1x1x160xf32>,
    } else {
    }
    return
  }
  func.func @transform_0(%arg0: i32, %arg1: i32, %arg2: i32) -> (i32, i32, i32) {
    %c0_i32 = arith.constant 0 : i32
    %c0_i32_0 = arith.constant 0 : i32
    return %arg0, %arg1, %c0_i32 : i32, i32, i32
  }
  func.func @transform_1(%arg0: i32, %arg1: i32, %arg2: i32) -> (i32, i32, i32) {
    %c0_i32 = arith.constant 0 : i32
    %c0_i32_0 = arith.constant 0 : i32
    return %arg0, %c0_i32, %arg2 : i32, i32, i32
  }
  func.func @transform_2(%arg0: i32, %arg1: i32, %arg2: i32) -> (i32, i32, i32) {
    %c0_i32 = arith.constant 0 : i32
    %c0_i32_0 = arith.constant 0 : i32
    return %arg0, %c0_i32, %arg2 : i32, i32, i32
  }
  func.func @transform_3(%arg0: i32, %arg1: i32, %arg2: i32) -> (i32, i32, i32) {
    %c0_i32 = arith.constant 0 : i32
    %c0_i32_0 = arith.constant 0 : i32
    return %arg0, %c0_i32, %arg1 : i32, i32, i32
  }
  func.func @transform_4(%arg0: i32, %arg1: i32, %arg2: i32) -> (i32, i32, i32) {
    %c1_i32 = arith.constant 1 : i32
    %0 = arith.muli %arg0, %c1_i32 : i32
    %1 = arith.addi %0, %arg1 : i32
    %c0_i32 = arith.constant 0 : i32
    %c0_i32_0 = arith.constant 0 : i32
    return %1, %c0_i32, %arg2 : i32, i32, i32
  }
}

</mosaic_0001>

<llo_original>
// kernel: tpu_custom_call.1
$region0: #{tpu_custom_call.1}
  #allocation0 [shape = 'u32[]', space=smem, size = 0x4, offset = 0x4, fixed_abs, tag = 'smem constant byte address 0x4 - core index']
  #allocation1 [shape = 'u32[144,128]{1,0:T(1,128)}', space=vmem, size = 0x12000, scoped, tag = 'internal scratch']
  #allocation2 [shape = 'f32[160,1]{1,0:T(8,128)}', space=vmem, size = 0x14000, scoped, tag = 'scratch operand']
  #allocation3 [shape = 'f32[160,128]{1,0:T(8,128)}', space=vmem, size = 0x14000, scoped, tag = 'scratch operand']
  %s0 = inlined_call_operand.vmem [shape: f32[2,160,3], index: 0, kind: input, shape index: {}]
  %s1 = inlined_call_operand.vmem [shape: f32[2,3,256], index: 1, kind: input, shape index: {}]
  %s2 = inlined_call_operand.vmem [shape: f32[2,1,256], index: 2, kind: input, shape index: {}]
  %s3 = inlined_call_operand.hbm [shape: f32[2,1,160], index: 3, kind: output, shape index: {0}]
  %s4 = inlined_call_operand.hbm [shape: f32[2,1,256], index: 4, kind: output, shape index: {1}]
  %5 = xla_tuple %s3, %s4
  %s6 = sld [smem:[#allocation0]]
  $region61: #{tpu_custom_call.1} parent=0
    _
  %s8 = ssub.s32 1, %s6
  %s9 = scalar_select 0, %s8, %s6
  $region1: #{tpu_custom_call.1} parent=0
    #allocation4 [shape = 'u8[2048]{0}', space=vmem, size = 0x800, scoped, tag = 'output window, operand 0']
    #allocation5 [shape = 's32[2]{0}', space=sflag, size = 0x8, scoped, tag = 'scoped memory for tpu_custom_call.1']
    #allocation6 [shape = 'u8[2048]{0}', space=vmem, size = 0x800, scoped, tag = 'output window, operand 1']
    #allocation7 [shape = 's32[2]{0}', space=sflag, size = 0x8, scoped, tag = 'scoped memory for tpu_custom_call.1']
    %10 = vsyncpa [#allocation5], 0
    %s11 = scalar_lea.sflag [#allocation5], 1
    %12 = vsyncpa %s11, 0
    %13 = vsyncpa [#allocation7], 0
    %s14 = scalar_lea.sflag [#allocation7], 1
    %15 = vsyncpa %s14, 0
    loop: start=0, step=1, limit=4
    $region2: #{tpu_custom_call.1} parent=1 // loop_pre_header
      _
    $region3: #{tpu_custom_call.1} parent=1 // loop_header
      %s17 = sphi 0, %s21
      %p18 = scmp.ge.s32.totalorder %s17, 4
      %s24 = sphi 0, %s43
      %s25 = sphi 0, %s39
      %s26 = sphi 0, %s35
      %s27 = sphi 0, %s24
      %s28 = sphi 0, %s25
      %s29 = sphi 0, %s26
      %s30 = sphi 0, %s27
      %s31 = sphi 0, %s28
      %s32 = sphi 0, %s29
      %s48 = sphi 0, %s50
      %s51 = sphi 0, %s48
      %s52 = sphi 0, %s51
      %s68 = sphi 0, %s52
      %s76 = sphi 0, %s78
      %s79 = sphi 0, %s76
      %s80 = sphi 0, %s79
      %s96 = sphi 0, %s80
      %s104 = sphi 0, %s106
      %s107 = sphi 0, %s104
      %s108 = sphi 0, %s107
      %s124 = sphi 0, %s108
      %s132 = sphi 0, %s134
      %s135 = sphi 0, %s132
      %s136 = sphi 0, %s135
      %s152 = sphi 0, %s136
      %s162 = sphi 0, %s164
      %s165 = sphi 0, %s162
      %s166 = sphi 0, %s165
      %s182 = sphi 0, %s166
    $region4: #{tpu_custom_call.1} parent=1 // loop_header_branch
      %20 = sbr.rel (%p18) target = $region8
    $region5: #{tpu_custom_call.1} parent=1 // loop_body
      %s22 = ssub.s32 %s17, 1
      %s23 = ssub.s32 %s17, 2
      %s33 = sadd.s32 1, %s26
      %p34 = scmp.ge.s32.totalorder %s33, 1
      %s35 = scalar_select %p34, 0, %s33
      %s36 = sadd.s32 1, %s25
      %s37 = scalar_select %p34, %s36, %s25
      %p38 = scmp.ge.s32.totalorder %s37, 1
      %s39 = scalar_select %p38, 0, %s37
      %s40 = sadd.s32 1, %s24
      %s41 = scalar_select %p38, %s40, %s24
      %p42 = scmp.ge.s32.totalorder %s41, 2
      %s43 = scalar_select %p42, 0, %s41
      %s44 = ssub.s32 %s24, %s43
      %s45 = ssub.s32 %s25, %s39
      %s46 = sor.u32 %s44, %s45
      %p47 = scmp.eq.s32.totalorder %s46, 0
      %s49 = sadd.s32 %s48, 1
      %s50 = scalar_select %p47, %s48, %s49
      %p53 = pneg %p47
      %p54 = scmp.eq.s32.totalorder %s17, 1
      %p55 = por %p53, %p54
      %p56 = scmp.ne.s32.totalorder %s48, %s51
      %p57 = scmp.eq.s32.totalorder %s17, 0
      %p58 = por %p56, %p57
      %p59 = scmp.ne.s32.totalorder %s48, %s51
      %p60 = scmp.eq.s32.totalorder %s22, 1
      %p61 = por %p59, %p60
      %p62 = scmp.ne.s32.totalorder %s51, %s52
      %p63 = scmp.eq.s32.totalorder %s22, 0
      %p64 = por %p62, %p63
      %p65 = scmp.ne.s32.totalorder %s51, %s52
      %p66 = scmp.eq.s32.totalorder %s23, 1
      %p67 = por %p65, %p66
      %p69 = scmp.ne.s32.totalorder %s52, %s68
      %p70 = scmp.eq.s32.totalorder %s23, 0
      %p71 = por %p69, %p70
      %s72 = ssub.s32 %s24, %s43
      %s73 = ssub.s32 %s26, %s35
      %s74 = sor.u32 %s72, %s73
      %p75 = scmp.eq.s32.totalorder %s74, 0
      %s77 = sadd.s32 %s76, 1
      %s78 = scalar_select %p75, %s76, %s77
      %p81 = pneg %p75
      %p82 = scmp.eq.s32.totalorder %s17, 1
      %p83 = por %p81, %p82
      %p84 = scmp.ne.s32.totalorder %s76, %s79
      %p85 = scmp.eq.s32.totalorder %s17, 0
      %p86 = por %p84, %p85
      %p87 = scmp.ne.s32.totalorder %s76, %s79
      %p88 = scmp.eq.s32.totalorder %s22, 1
      %p89 = por %p87, %p88
      %p90 = scmp.ne.s32.totalorder %s79, %s80
      %p91 = scmp.eq.s32.totalorder %s22, 0
      %p92 = por %p90, %p91
      %p93 = scmp.ne.s32.totalorder %s79, %s80
      %p94 = scmp.eq.s32.totalorder %s23, 1
      %p95 = por %p93, %p94
      %p97 = scmp.ne.s32.totalorder %s80, %s96
      %p98 = scmp.eq.s32.totalorder %s23, 0
      %p99 = por %p97, %p98
      %s100 = ssub.s32 %s24, %s43
      %s101 = ssub.s32 %s26, %s35
      %s102 = sor.u32 %s100, %s101
      %p103 = scmp.eq.s32.totalorder %s102, 0
      %s105 = sadd.s32 %s104, 1
      %s106 = scalar_select %p103, %s104, %s105
      %p109 = pneg %p103
      %p110 = scmp.eq.s32.totalorder %s17, 1
      %p111 = por %p109, %p110
      %p112 = scmp.ne.s32.totalorder %s104, %s107
      %p113 = scmp.eq.s32.totalorder %s17, 0
      %p114 = por %p112, %p113
      %p115 = scmp.ne.s32.totalorder %s104, %s107
      %p116 = scmp.eq.s32.totalorder %s22, 1
      %p117 = por %p115, %p116
      %p118 = scmp.ne.s32.totalorder %s107, %s108
      %p119 = scmp.eq.s32.totalorder %s22, 0
      %p120 = por %p118, %p119
      %p121 = scmp.ne.s32.totalorder %s107, %s108
      %p122 = scmp.eq.s32.totalorder %s23, 1
      %p123 = por %p121, %p122
      %p125 = scmp.ne.s32.totalorder %s108, %s124
      %p126 = scmp.eq.s32.totalorder %s23, 0
      %p127 = por %p125, %p126
      %s128 = ssub.s32 %s24, %s43
      %s129 = ssub.s32 %s25, %s39
      %s130 = sor.u32 %s128, %s129
      %p131 = scmp.eq.s32.totalorder %s130, 0
      %s133 = sadd.s32 %s132, 1
      %s134 = scalar_select %p131, %s132, %s133
      %p137 = pneg %p131
      %p138 = scmp.eq.s32.totalorder %s17, 1
      %p139 = por %p137, %p138
      %p140 = scmp.ne.s32.totalorder %s132, %s135
      %p141 = scmp.eq.s32.totalorder %s17, 0
      %p142 = por %p140, %p141
      %p143 = scmp.ne.s32.totalorder %s132, %s135
      %p144 = scmp.eq.s32.totalorder %s22, 1
      %p145 = por %p143, %p144
      %p146 = scmp.ne.s32.totalorder %s135, %s136
      %p147 = scmp.eq.s32.totalorder %s22, 0
      %p148 = por %p146, %p147
      %p149 = scmp.ne.s32.totalorder %s135, %s136
      %p150 = scmp.eq.s32.totalorder %s23, 1
      %p151 = por %p149, %p150
      %p153 = scmp.ne.s32.totalorder %s136, %s152
      %p154 = scmp.eq.s32.totalorder %s23, 0
      %p155 = por %p153, %p154
      %s156 = sadd.s32 %s24, %s25
      %s157 = sadd.s32 %s43, %s39
      %s158 = ssub.s32 %s156, %s157
      %s159 = ssub.s32 %s26, %s35
      %s160 = sor.u32 %s158, %s159
      %p161 = scmp.eq.s32.totalorder %s160, 0
      %s163 = sadd.s32 %s162, 1
      %s164 = scalar_select %p161, %s162, %s163
      %p167 = pneg %p161
      %p168 = scmp.eq.s32.totalorder %s17, 1
      %p169 = por %p167, %p168
      %p170 = scmp.ne.s32.totalorder %s162, %s165
      %p171 = scmp.eq.s32.totalorder %s17, 0
      %p172 = por %p170, %p171
      %p173 = scmp.ne.s32.totalorder %s162, %s165
      %p174 = scmp.eq.s32.totalorder %s22, 1
      %p175 = por %p173, %p174
      %p176 = scmp.ne.s32.totalorder %s165, %s166
      %p177 = scmp.eq.s32.totalorder %s22, 0
      %p178 = por %p176, %p177
      %p179 = scmp.ne.s32.totalorder %s165, %s166
      %p180 = scmp.eq.s32.totalorder %s23, 1
      %p181 = por %p179, %p180
      %p183 = scmp.ne.s32.totalorder %s166, %s182
      %p184 = scmp.eq.s32.totalorder %s23, 0
      %p185 = por %p183, %p184
      %p186 = scmp.le.s32.totalorder 1, %s17
      %p187 = scmp.lt.s32.totalorder %s17, 3
      %p188 = pnand %p186, %p187
      %p189 = pneg %p188
      // Predicated region
      $region9: #{tpu_custom_call.1} parent=5 // pred_check
        _
      $region10: #{tpu_custom_call.1} parent=5 // pred_check_branch
        %191 = sbr.rel (%p188) target = $region12
      $region11: #{tpu_custom_call.1} parent=5 // pred_region
        %s192 = ssub.s32 %s17, 1
      $region12: #{tpu_custom_call.1} parent=5 // pred_fallthru
        _
      %p193 = scmp.lt.s32.totalorder %s17, 2
      // Predicated region
      $region13: #{tpu_custom_call.1} parent=5 // pred_check
        %p194 = pneg %p193
      $region14: #{tpu_custom_call.1} parent=5 // pred_check_branch
        %196 = sbr.rel (%p194) target = $region16
      $region15: #{tpu_custom_call.1} parent=5 // pred_region
        // Predicated region
        $region17: #{tpu_custom_call.1} parent=15 // pred_check
          %p197 = pneg %p58
        $region18: #{tpu_custom_call.1} parent=15 // pred_check_branch
          %199 = sbr.rel (%p197) target = $region20
        $region19: #{tpu_custom_call.1} parent=15 // pred_region
          %s200 = smul.u32 20, %s25
          %p201 = scmp.lt.s32.totalorder %s24, 1
          %s202 = scalar_select %p201, %s24, 1
          %p203 = scmp.lt.s32.totalorder %s200, 19
          %s204 = scalar_select %p203, %s200, 19
          %s205 = smul.addr %s202, 20
          %s206 = sadd.s32 %s204, %s205
          %s207 = smul.addr %s206, 8
          %s208 = scalar_lea.vmem %s0, %s207
          %s209 = smul.u32 20, %s25
        $region20: #{tpu_custom_call.1} parent=15 // pred_fallthru
          _
        // Predicated region
        $region21: #{tpu_custom_call.1} parent=15 // pred_check
          %p210 = pneg %p86
        $region22: #{tpu_custom_call.1} parent=15 // pred_check_branch
          %212 = sbr.rel (%p210) target = $region24
        $region23: #{tpu_custom_call.1} parent=15 // pred_region
          %s213 = smul.u32 2, %s26
          %p214 = scmp.lt.s32.totalorder %s24, 1
          %s215 = scalar_select %p214, %s24, 1
          %p216 = scmp.lt.s32.totalorder %s213, 1
          %s217 = scalar_select %p216, %s213, 1
          %s218 = smul.addr %s215, 2
          %s219 = sadd.s32 %s217, %s218
          %s220 = smul.addr %s219, 4
          %s221 = scalar_lea.vmem %s1, %s220
          %s222 = smul.u32 2, %s26
        $region24: #{tpu_custom_call.1} parent=15 // pred_fallthru
          _
        // Predicated region
        $region25: #{tpu_custom_call.1} parent=15 // pred_check
          %p223 = pneg %p114
        $region26: #{tpu_custom_call.1} parent=15 // pred_check_branch
          %225 = sbr.rel (%p223) target = $region28
        $region27: #{tpu_custom_call.1} parent=15 // pred_region
          %s226 = smul.u32 2, %s26
          %p227 = scmp.lt.s32.totalorder %s24, 1
          %s228 = scalar_select %p227, %s24, 1
          %p229 = scmp.lt.s32.totalorder %s226, 1
          %s230 = scalar_select %p229, %s226, 1
          %s231 = smul.addr %s228, 2
          %s232 = sadd.s32 %s230, %s231
          %s233 = scalar_lea.vmem %s2, %s232
          %s234 = smul.u32 2, %s26
        $region28: #{tpu_custom_call.1} parent=15 // pred_fallthru
          _
      $region16: #{tpu_custom_call.1} parent=5 // pred_fallthru
        _
      %p235 = scmp.le.s32.totalorder 1, %s17
      %p236 = scmp.lt.s32.totalorder %s17, 3
      %p237 = pnand %p235, %p236
      %p238 = pneg %p237
      // Predicated region
      $region29: #{tpu_custom_call.1} parent=5 // pred_check
        _
      $region30: #{tpu_custom_call.1} parent=5 // pred_check_branch
        %240 = sbr.rel (%p237) target = $region32
      $region31: #{tpu_custom_call.1} parent=5 // pred_region
        %s241 = ssub.s32 %s17, 1
        %s242 = smul.u32 20, %s28
        %p243 = scmp.lt.s32.totalorder %s27, 1
        %s244 = scalar_select %p243, %s27, 1
        %p245 = scmp.lt.s32.totalorder %s242, 19
        %s246 = scalar_select %p245, %s242, 19
        %s247 = smul.addr %s244, 20
        %s248 = sadd.s32 %s246, %s247
        %s249 = smul.addr %s248, 8
        %s250 = scalar_lea.vmem %s0, %s249
        %p251 = pneg %p64
        %p252 = pneg %p61
        %s253 = smul.u32 2, %s29
        %p254 = scmp.lt.s32.totalorder %s27, 1
        %s255 = scalar_select %p254, %s27, 1
        %p256 = scmp.lt.s32.totalorder %s253, 1
        %s257 = scalar_select %p256, %s253, 1
        %s258 = smul.addr %s255, 2
        %s259 = sadd.s32 %s257, %s258
        %s260 = smul.addr %s259, 4
        %s261 = scalar_lea.vmem %s1, %s260
        %p262 = pneg %p92
        %p263 = pneg %p89
        %s264 = smul.u32 2, %s29
        %p265 = scmp.lt.s32.totalorder %s27, 1
        %s266 = scalar_select %p265, %s27, 1
        %p267 = scmp.lt.s32.totalorder %s264, 1
        %s268 = scalar_select %p267, %s264, 1
        %s269 = smul.addr %s266, 2
        %s270 = sadd.s32 %s268, %s269
        %s271 = scalar_lea.vmem %s2, %s270
        %p272 = pneg %p120
        %p273 = pneg %p117
        %p274 = pneg %p148
        %p275 = pneg %p145
        %s276 = sand.u32 %s135, 1
        %s277 = scalar_lea.sflag [#allocation5], %s276
        %s278 = sand.u32 %s135, 1
        %s279 = smul.addr %s278, 2
        %s280 = scalar_lea.vmem [#allocation4], %s279
        %p281 = pneg %p178
        %p282 = pneg %p175
        %s283 = sand.u32 %s165, 1
        %s284 = scalar_lea.sflag [#allocation7], %s283
        %s285 = sand.u32 %s165, 1
        %s286 = smul.addr %s285, 2
        %s287 = scalar_lea.vmem [#allocation6], %s286
        %s288 = smul.u32 20, %s28
        %p289 = scmp.lt.s32.totalorder %s27, 1
        %s290 = scalar_select %p289, %s27, 1
        %p291 = scmp.lt.s32.totalorder %s288, 19
        %s292 = scalar_select %p291, %s288, 19
        %s293 = smul.addr %s290, 20
        %s294 = sadd.s32 %s292, %s293
        %s295 = smul.addr %s294, 8
        %s296 = scalar_lea.vmem %s0, %s295
        %s297 = smul.u32 20, %s28
        %s298 = smul.u32 2, %s29
        %p299 = scmp.lt.s32.totalorder %s27, 1
        %s300 = scalar_select %p299, %s27, 1
        %p301 = scmp.lt.s32.totalorder %s298, 1
        %s302 = scalar_select %p301, %s298, 1
        %s303 = smul.addr %s300, 2
        %s304 = sadd.s32 %s302, %s303
        %s305 = smul.addr %s304, 4
        %s306 = scalar_lea.vmem %s1, %s305
        %s307 = smul.u32 2, %s29
        %s308 = smul.u32 2, %s29
        %p309 = scmp.lt.s32.totalorder %s27, 1
        %s310 = scalar_select %p309, %s27, 1
        %p311 = scmp.lt.s32.totalorder %s308, 1
        %s312 = scalar_select %p311, %s308, 1
        %s313 = smul.addr %s310, 2
        %s314 = sadd.s32 %s312, %s313
        %s315 = scalar_lea.vmem %s2, %s314
        %s316 = smul.u32 2, %s29
        %s317 = smul.u32 2, %s28
        %s318 = sadd.s32 %s27, %s28
        %s319 = smul.u32 2, %s29
        %p320 = scmp.eq.s32.totalorder %s29, 0
        // Predicated region
        $region33: #{tpu_custom_call.1} parent=31 // pred_check
          %p321 = pneg %p320
        $region34: #{tpu_custom_call.1} parent=31 // pred_check_branch
          %323 = sbr.rel (%p321) target = $region36
        $region35: #{tpu_custom_call.1} parent=31 // pred_region
          %v324 = vld [vmem:[%s296] sm:$0xff]
          %v325 = vld [vmem:[%s296 + $0x8] sm:$0xff]
          %v326 = vld [vmem:[%s296 + $0x10] sm:$0xff]
          %v327 = vld [vmem:[%s296 + $0x18] sm:$0xff]
          %v328 = vld [vmem:[%s296 + $0x20] sm:$0xff]
          %v329 = vld [vmem:[%s296 + $0x28] sm:$0xff]
          %v330 = vld [vmem:[%s296 + $0x30] sm:$0xff]
          %v331 = vld [vmem:[%s296 + $0x38] sm:$0xff]
          %v332 = vld [vmem:[%s296 + $0x40] sm:$0xff]
          %v333 = vld [vmem:[%s296 + $0x48] sm:$0xff]
          %v334 = vld [vmem:[%s296 + $0x50] sm:$0xff]
          %v335 = vld [vmem:[%s296 + $0x58] sm:$0xff]
          %v336 = vld [vmem:[%s296 + $0x60] sm:$0xff]
          %v337 = vld [vmem:[%s296 + $0x68] sm:$0xff]
          %v338 = vld [vmem:[%s296 + $0x70] sm:$0xff]
          %v339 = vld [vmem:[%s296 + $0x78] sm:$0xff]
          %v340 = vld [vmem:[%s296 + $0x80] sm:$0xff]
          %v341 = vld [vmem:[%s296 + $0x88] sm:$0xff]
          %v342 = vld [vmem:[%s296 + $0x90] sm:$0xff]
          %v343 = vld [vmem:[%s296 + $0x98] sm:$0xff]
          %v344 = vmul.f32 %v324, %v324
          %v345 = vmul.f32 %v325, %v325
          %v346 = vmul.f32 %v326, %v326
          %v347 = vmul.f32 %v327, %v327
          %v348 = vmul.f32 %v328, %v328
          %v349 = vmul.f32 %v329, %v329
          %v350 = vmul.f32 %v330, %v330
          %v351 = vmul.f32 %v331, %v331
          %v352 = vmul.f32 %v332, %v332
          %v353 = vmul.f32 %v333, %v333
          %v354 = vmul.f32 %v334, %v334
          %v355 = vmul.f32 %v335, %v335
          %v356 = vmul.f32 %v336, %v336
          %v357 = vmul.f32 %v337, %v337
          %v358 = vmul.f32 %v338, %v338
          %v359 = vmul.f32 %v339, %v339
          %v360 = vmul.f32 %v340, %v340
          %v361 = vmul.f32 %v341, %v341
          %v362 = vmul.f32 %v342, %v342
          %v363 = vmul.f32 %v343, %v343
          %vm364 = vcmask 23552
          %v365 = vsel %vm364, %v344, 0.0
          %366 = vadd.xlane.f32.xlu0 %v365
          %v367 = vpop.xlane.xlu0 %366
          %v368 = vsel %vm364, %v345, 0.0
          %369 = vadd.xlane.f32.xlu0 %v368
          %v370 = vpop.xlane.xlu0 %369
          %v371 = vsel %vm364, %v346, 0.0
          %372 = vadd.xlane.f32.xlu0 %v371
          %v373 = vpop.xlane.xlu0 %372
          %v374 = vsel %vm364, %v347, 0.0
          %375 = vadd.xlane.f32.xlu0 %v374
          %v376 = vpop.xlane.xlu0 %375
          %v377 = vsel %vm364, %v348, 0.0
          %378 = vadd.xlane.f32.xlu0 %v377
          %v379 = vpop.xlane.xlu0 %378
          %v380 = vsel %vm364, %v349, 0.0
          %381 = vadd.xlane.f32.xlu0 %v380
          %v382 = vpop.xlane.xlu0 %381
          %v383 = vsel %vm364, %v350, 0.0
          %384 = vadd.xlane.f32.xlu0 %v383
          %v385 = vpop.xlane.xlu0 %384
          %v386 = vsel %vm364, %v351, 0.0
          %387 = vadd.xlane.f32.xlu0 %v386
          %v388 = vpop.xlane.xlu0 %387
          %v389 = vsel %vm364, %v352, 0.0
          %390 = vadd.xlane.f32.xlu0 %v389
          %v391 = vpop.xlane.xlu0 %390
          %v392 = vsel %vm364, %v353, 0.0
          %393 = vadd.xlane.f32.xlu0 %v392
          %v394 = vpop.xlane.xlu0 %393
          %v395 = vsel %vm364, %v354, 0.0
          %396 = vadd.xlane.f32.xlu0 %v395
          %v397 = vpop.xlane.xlu0 %396
          %v398 = vsel %vm364, %v355, 0.0
          %399 = vadd.xlane.f32.xlu0 %v398
          %v400 = vpop.xlane.xlu0 %399
          %v401 = vsel %vm364, %v356, 0.0
          %402 = vadd.xlane.f32.xlu0 %v401
          %v403 = vpop.xlane.xlu0 %402
          %v404 = vsel %vm364, %v357, 0.0
          %405 = vadd.xlane.f32.xlu0 %v404
          %v406 = vpop.xlane.xlu0 %405
          %v407 = vsel %vm364, %v358, 0.0
          %408 = vadd.xlane.f32.xlu0 %v407
          %v409 = vpop.xlane.xlu0 %408
          %v410 = vsel %vm364, %v359, 0.0
          %411 = vadd.xlane.f32.xlu0 %v410
          %v412 = vpop.xlane.xlu0 %411
          %v413 = vsel %vm364, %v360, 0.0
          %414 = vadd.xlane.f32.xlu0 %v413
          %v415 = vpop.xlane.xlu0 %414
          %v416 = vsel %vm364, %v361, 0.0
          %417 = vadd.xlane.f32.xlu0 %v416
          %v418 = vpop.xlane.xlu0 %417
          %v419 = vsel %vm364, %v362, 0.0
          %420 = vadd.xlane.f32.xlu0 %v419
          %v421 = vpop.xlane.xlu0 %420
          %v422 = vsel %vm364, %v363, 0.0
          %423 = vadd.xlane.f32.xlu0 %v422
          %v424 = vpop.xlane.xlu0 %423
          %vm425 = vcmask 7168
          %426 = vst.msk [vmem:[#allocation2] sm:$0xff] %vm425, %v367
          %427 = vst.msk [vmem:[#allocation2 + $0x8] sm:$0xff] %vm425, %v370
          %428 = vst.msk [vmem:[#allocation2 + $0x10] sm:$0xff] %vm425, %v373
          %429 = vst.msk [vmem:[#allocation2 + $0x18] sm:$0xff] %vm425, %v376
          %430 = vst.msk [vmem:[#allocation2 + $0x20] sm:$0xff] %vm425, %v379
          %431 = vst.msk [vmem:[#allocation2 + $0x28] sm:$0xff] %vm425, %v382
          %432 = vst.msk [vmem:[#allocation2 + $0x30] sm:$0xff] %vm425, %v385
          %433 = vst.msk [vmem:[#allocation2 + $0x38] sm:$0xff] %vm425, %v388
          %434 = vst.msk [vmem:[#allocation2 + $0x40] sm:$0xff] %vm425, %v391
          %435 = vst.msk [vmem:[#allocation2 + $0x48] sm:$0xff] %vm425, %v394
          %436 = vst.msk [vmem:[#allocation2 + $0x50] sm:$0xff] %vm425, %v397
          %437 = vst.msk [vmem:[#allocation2 + $0x58] sm:$0xff] %vm425, %v400
          %438 = vst.msk [vmem:[#allocation2 + $0x60] sm:$0xff] %vm425, %v403
          %439 = vst.msk [vmem:[#allocation2 + $0x68] sm:$0xff] %vm425, %v406
          %440 = vst.msk [vmem:[#allocation2 + $0x70] sm:$0xff] %vm425, %v409
          %441 = vst.msk [vmem:[#allocation2 + $0x78] sm:$0xff] %vm425, %v412
          %442 = vst.msk [vmem:[#allocation2 + $0x80] sm:$0xff] %vm425, %v415
          %443 = vst.msk [vmem:[#allocation2 + $0x88] sm:$0xff] %vm425, %v418
          %444 = vst.msk [vmem:[#allocation2 + $0x90] sm:$0xff] %vm425, %v421
          %445 = vst.msk [vmem:[#allocation2 + $0x98] sm:$0xff] %vm425, %v424
          %446 = vst [vmem:[#allocation3] sm:$0xff] 1e+30
          %447 = vst [vmem:[#allocation3 + $0x8] sm:$0xff] 1e+30
          %448 = vst [vmem:[#allocation3 + $0x10] sm:$0xff] 1e+30
          %449 = vst [vmem:[#allocation3 + $0x18] sm:$0xff] 1e+30
          %450 = vst [vmem:[#allocation3 + $0x20] sm:$0xff] 1e+30
          %451 = vst [vmem:[#allocation3 + $0x28] sm:$0xff] 1e+30
          %452 = vst [vmem:[#allocation3 + $0x30] sm:$0xff] 1e+30
          %453 = vst [vmem:[#allocation3 + $0x38] sm:$0xff] 1e+30
          %454 = vst [vmem:[#allocation3 + $0x40] sm:$0xff] 1e+30
          %455 = vst [vmem:[#allocation3 + $0x48] sm:$0xff] 1e+30
          %456 = vst [vmem:[#allocation3 + $0x50] sm:$0xff] 1e+30
          %457 = vst [vmem:[#allocation3 + $0x58] sm:$0xff] 1e+30
          %458 = vst [vmem:[#allocation3 + $0x60] sm:$0xff] 1e+30
          %459 = vst [vmem:[#allocation3 + $0x68] sm:$0xff] 1e+30
          %460 = vst [vmem:[#allocation3 + $0x70] sm:$0xff] 1e+30
          %461 = vst [vmem:[#allocation3 + $0x78] sm:$0xff] 1e+30
          %462 = vst [vmem:[#allocation3 + $0x80] sm:$0xff] 1e+30
          %463 = vst [vmem:[#allocation3 + $0x88] sm:$0xff] 1e+30
          %464 = vst [vmem:[#allocation3 + $0x90] sm:$0xff] 1e+30
          %465 = vst [vmem:[#allocation3 + $0x98] sm:$0xff] 1e+30
        $region36: #{tpu_custom_call.1} parent=31 // pred_fallthru
          _
        %v466 = vld [vmem:[%s296] sm:$0xff]
        %v467 = vld [vmem:[%s296 + $0x8] sm:$0xff]
        %v468 = vld [vmem:[%s296 + $0x10] sm:$0xff]
        %v469 = vld [vmem:[%s296 + $0x18] sm:$0xff]
        %v470 = vld [vmem:[%s296 + $0x20] sm:$0xff]
        %v471 = vld [vmem:[%s296 + $0x28] sm:$0xff]
        %v472 = vld [vmem:[%s296 + $0x30] sm:$0xff]
        %v473 = vld [vmem:[%s296 + $0x38] sm:$0xff]
        %v474 = vld [vmem:[%s296 + $0x40] sm:$0xff]
        %v475 = vld [vmem:[%s296 + $0x48] sm:$0xff]
        %v476 = vld [vmem:[%s296 + $0x50] sm:$0xff]
        %v477 = vld [vmem:[%s296 + $0x58] sm:$0xff]
        %v478 = vld [vmem:[%s296 + $0x60] sm:$0xff]
        %v479 = vld [vmem:[%s296 + $0x68] sm:$0xff]
        %v480 = vld [vmem:[%s296 + $0x70] sm:$0xff]
        %v481 = vld [vmem:[%s296 + $0x78] sm:$0xff]
        %v482 = vld [vmem:[%s296 + $0x80] sm:$0xff]
        %v483 = vld [vmem:[%s296 + $0x88] sm:$0xff]
        %v484 = vld [vmem:[%s296 + $0x90] sm:$0xff]
        %v485 = vld [vmem:[%s296 + $0x98] sm:$0xff]
        %v486 = vld [vmem:[#allocation2] sm:$0xff]
        %v487 = vld [vmem:[#allocation2 + $0x8] sm:$0xff]
        %v488 = vld [vmem:[#allocation2 + $0x10] sm:$0xff]
        %v489 = vld [vmem:[#allocation2 + $0x18] sm:$0xff]
        %v490 = vld [vmem:[#allocation2 + $0x20] sm:$0xff]
        %v491 = vld [vmem:[#allocation2 + $0x28] sm:$0xff]
        %v492 = vld [vmem:[#allocation2 + $0x30] sm:$0xff]
        %v493 = vld [vmem:[#allocation2 + $0x38] sm:$0xff]
        %v494 = vld [vmem:[#allocation2 + $0x40] sm:$0xff]
        %v495 = vld [vmem:[#allocation2 + $0x48] sm:$0xff]
        %v496 = vld [vmem:[#allocation2 + $0x50] sm:$0xff]
        %v497 = vld [vmem:[#allocation2 + $0x58] sm:$0xff]
        %v498 = vld [vmem:[#allocation2 + $0x60] sm:$0xff]
        %v499 = vld [vmem:[#allocation2 + $0x68] sm:$0xff]
        %v500 = vld [vmem:[#allocation2 + $0x70] sm:$0xff]
        %v501 = vld [vmem:[#allocation2 + $0x78] sm:$0xff]
        %v502 = vld [vmem:[#allocation2 + $0x80] sm:$0xff]
        %v503 = vld [vmem:[#allocation2 + $0x88] sm:$0xff]
        %v504 = vld [vmem:[#allocation2 + $0x90] sm:$0xff]
        %v505 = vld [vmem:[#allocation2 + $0x98] sm:$0xff]
        %v506 = vld [vmem:[%s306] sm:$0x77]
        %v507 = vld [vmem:[%s315] sm:$0x3]
        %509 = vset.pattern.permute.xlu0 0
        %510 = vperm.xlu0 %509, %v486
        %v511 = vpop.permute.xlu0 %510
        %514 = vset.pattern.permute.xlu0 0
        %515 = vperm.xlu0 %514, %v487
        %v516 = vpop.permute.xlu0 %515
        %519 = vset.pattern.permute.xlu0 0
        %520 = vperm.xlu0 %519, %v488
        %v521 = vpop.permute.xlu0 %520
        %524 = vset.pattern.permute.xlu0 0
        %525 = vperm.xlu0 %524, %v489
        %v526 = vpop.permute.xlu0 %525
        %529 = vset.pattern.permute.xlu0 0
        %530 = vperm.xlu0 %529, %v490
        %v531 = vpop.permute.xlu0 %530
        %534 = vset.pattern.permute.xlu0 0
        %535 = vperm.xlu0 %534, %v491
        %v536 = vpop.permute.xlu0 %535
        %539 = vset.pattern.permute.xlu0 0
        %540 = vperm.xlu0 %539, %v492
        %v541 = vpop.permute.xlu0 %540
        %544 = vset.pattern.permute.xlu0 0
        %545 = vperm.xlu0 %544, %v493
        %v546 = vpop.permute.xlu0 %545
        %549 = vset.pattern.permute.xlu0 0
        %550 = vperm.xlu0 %549, %v494
        %v551 = vpop.permute.xlu0 %550
        %554 = vset.pattern.permute.xlu0 0
        %555 = vperm.xlu0 %554, %v495
        %v556 = vpop.permute.xlu0 %555
        %559 = vset.pattern.permute.xlu0 0
        %560 = vperm.xlu0 %559, %v496
        %v561 = vpop.permute.xlu0 %560
        %564 = vset.pattern.permute.xlu0 0
        %565 = vperm.xlu0 %564, %v497
        %v566 = vpop.permute.xlu0 %565
        %569 = vset.pattern.permute.xlu0 0
        %570 = vperm.xlu0 %569, %v498
        %v571 = vpop.permute.xlu0 %570
        %574 = vset.pattern.permute.xlu0 0
        %575 = vperm.xlu0 %574, %v499
        %v576 = vpop.permute.xlu0 %575
        %579 = vset.pattern.permute.xlu0 0
        %580 = vperm.xlu0 %579, %v500
        %v581 = vpop.permute.xlu0 %580
        %584 = vset.pattern.permute.xlu0 0
        %585 = vperm.xlu0 %584, %v501
        %v586 = vpop.permute.xlu0 %585
        %589 = vset.pattern.permute.xlu0 0
        %590 = vperm.xlu0 %589, %v502
        %v591 = vpop.permute.xlu0 %590
        %594 = vset.pattern.permute.xlu0 0
        %595 = vperm.xlu0 %594, %v503
        %v596 = vpop.permute.xlu0 %595
        %599 = vset.pattern.permute.xlu0 0
        %600 = vperm.xlu0 %599, %v504
        %v601 = vpop.permute.xlu0 %600
        %604 = vset.pattern.permute.xlu0 0
        %605 = vperm.xlu0 %604, %v505
        %v606 = vpop.permute.xlu0 %605
        %v609 = vcombine.high %v506, %v506
        %vm610 = vcmask 23552
        %v612 = vsel %vm610, %v466, 0
        %v615 = vsel %vm610, %v467, 0
        %v618 = vsel %vm610, %v468, 0
        %v621 = vsel %vm610, %v469, 0
        %v624 = vsel %vm610, %v470, 0
        %v627 = vsel %vm610, %v471, 0
        %v630 = vsel %vm610, %v472, 0
        %v633 = vsel %vm610, %v473, 0
        %v636 = vsel %vm610, %v474, 0
        %v639 = vsel %vm610, %v475, 0
        %v642 = vsel %vm610, %v476, 0
        %v645 = vsel %vm610, %v477, 0
        %v648 = vsel %vm610, %v478, 0
        %v651 = vsel %vm610, %v479, 0
        %v654 = vsel %vm610, %v480, 0
        %v657 = vsel %vm610, %v481, 0
        %v660 = vsel %vm610, %v482, 0
        %v663 = vsel %vm610, %v483, 0
        %v666 = vsel %vm610, %v484, 0
        %v669 = vsel %vm610, %v485, 0
        %vm671 = vcmask 1042432
        %v672 = vsel %vm671, %v506, 0
        %v674 = vsel %vm671, %v609, 0
        %676 = vmatprep.subr.mxu0 %v674
        %677 = vmatpush1.msra.mxu0 %v672
        %678 = vmatprep.subr.mxu0 0.0
        %679 = vmatpush1.msra.mxu0 0.0
        %680 = vmatprep.subr.mxu0 0.0
        %681 = vmatpush1.msra.mxu0 0.0
        %682 = vmatprep.subr.mxu0 0.0
        %683 = vmatpush1.msra.mxu0 0.0
        %684 = vmatprep.subr.mxu0 0.0
        %685 = vmatpush1.msra.mxu0 0.0
        %686 = vmatprep.subr.mxu0 0.0
        %687 = vmatpush1.msra.mxu0 0.0
        %688 = vmatprep.subr.mxu0 0.0
        %689 = vmatpush1.msra.mxu0 0.0
        %690 = vmatprep.subr.mxu0 0.0
        %691 = vmatpush1.msra.mxu0 0.0
        %692 = vmatprep.subr.mxu0 0.0
        %693 = vmatpush1.msra.mxu0 0.0
        %694 = vmatprep.subr.mxu0 0.0
        %695 = vmatpush1.msra.mxu0 0.0
        %696 = vmatprep.subr.mxu0 0.0
        %697 = vmatpush1.msra.mxu0 0.0
        %698 = vmatprep.subr.mxu0 0.0
        %699 = vmatpush1.msra.mxu0 0.0
        %700 = vmatprep.subr.mxu0 0.0
        %701 = vmatpush1.msra.mxu0 0.0
        %702 = vmatprep.subr.mxu0 0.0
        %703 = vmatpush1.msra.mxu0 0.0
        %704 = vmatprep.subr.mxu0 0.0
        %705 = vmatpush1.msra.mxu0 0.0
        %706 = vmatprep.subr.mxu0 0.0
        %707 = vmatpush1.msra.mxu0 0.0
        %708 = vmatprep.subr.mxu0 0.0
        %709 = vmatpush1.msra.mxu0 0.0
        %710 = vmatprep.subr.mxu0 0.0
        %711 = vmatpush1.msra.mxu0 0.0
        %712 = vmatprep.subr.mxu0 0.0
        %713 = vmatpush1.msra.mxu0 0.0
        %714 = vmatprep.subr.mxu0 0.0
        %715 = vmatpush1.msra.mxu0 0.0
        %716 = vmatprep.subr.mxu0 0.0
        %717 = vmatpush1.msra.mxu0 0.0
        %718 = vmatprep.subr.mxu0 0.0
        %719 = vmatpush1.msra.mxu0 0.0
        %720 = vmatprep.subr.mxu0 0.0
        %721 = vmatpush1.msra.mxu0 0.0
        %722 = vmatprep.subr.mxu0 0.0
        %723 = vmatpush1.msra.mxu0 0.0
        %724 = vmatprep.subr.mxu0 0.0
        %725 = vmatpush1.msra.mxu0 0.0
        %726 = vmatprep.subr.mxu0 0.0
        %727 = vmatpush1.msra.mxu0 0.0
        %728 = vmatprep.subr.mxu0 0.0
        %729 = vmatpush1.msra.mxu0 0.0
        %730 = vmatprep.subr.mxu0 0.0
        %731 = vmatpush1.msra.mxu0 0.0
        %732 = vmatprep.subr.mxu0 0.0
        %733 = vmatpush1.msra.mxu0 0.0
        %734 = vmatprep.subr.mxu0 0.0
        %735 = vmatpush1.msra.mxu0 0.0
        %736 = vmatprep.subr.mxu0 0.0
        %737 = vmatpush1.msra.mxu0 0.0
        %738 = vmatprep.subr.mxu0 0.0
        %739 = vmatpush1.msra.mxu0 0.0
        %740 = vmatprep.mubr.f32.mxu0 0.0
        %741 = vmatmul.mubr.f32.gmra.mrb[0].mxu0 %v612
        %v742 = vpop.f32.mrb[0].mxu0
        %v743 = vadd.f32 %v511, %v742
        %v744 = vpop.f32.mrb[0].mxu0
        %v745 = vadd.f32 %v511, %v744
        %746 = vmatprep.mubr.f32.mxu0 0.0
        %747 = vmatmul.mubr.f32.gmra.mrb[0].mxu0 %v615
        %v748 = vpop.f32.mrb[0].mxu0
        %v749 = vadd.f32 %v516, %v748
        %v750 = vpop.f32.mrb[0].mxu0
        %v751 = vadd.f32 %v516, %v750
        %752 = vmatprep.mubr.f32.mxu0 0.0
        %753 = vmatmul.mubr.f32.gmra.mrb[0].mxu0 %v618
        %v754 = vpop.f32.mrb[0].mxu0
        %v755 = vadd.f32 %v521, %v754
        %v756 = vpop.f32.mrb[0].mxu0
        %v757 = vadd.f32 %v521, %v756
        %758 = vmatprep.mubr.f32.mxu0 0.0
        %759 = vmatmul.mubr.f32.gmra.mrb[0].mxu0 %v621
        %v760 = vpop.f32.mrb[0].mxu0
        %v761 = vadd.f32 %v526, %v760
        %v762 = vpop.f32.mrb[0].mxu0
        %v763 = vadd.f32 %v526, %v762
        %764 = vmatprep.mubr.f32.mxu0 0.0
        %765 = vmatmul.mubr.f32.gmra.mrb[0].mxu0 %v624
        %v766 = vpop.f32.mrb[0].mxu0
        %v767 = vadd.f32 %v531, %v766
        %v768 = vpop.f32.mrb[0].mxu0
        %v769 = vadd.f32 %v531, %v768
        %770 = vmatprep.mubr.f32.mxu0 0.0
        %771 = vmatmul.mubr.f32.gmra.mrb[0].mxu0 %v627
        %v772 = vpop.f32.mrb[0].mxu0
        %v773 = vadd.f32 %v536, %v772
        %v774 = vpop.f32.mrb[0].mxu0
        %v775 = vadd.f32 %v536, %v774
        %776 = vmatprep.mubr.f32.mxu0 0.0
        %777 = vmatmul.mubr.f32.gmra.mrb[0].mxu0 %v630
        %v778 = vpop.f32.mrb[0].mxu0
        %v779 = vadd.f32 %v541, %v778
        %v780 = vpop.f32.mrb[0].mxu0
        %v781 = vadd.f32 %v541, %v780
        %782 = vmatprep.mubr.f32.mxu0 0.0
        %783 = vmatmul.mubr.f32.gmra.mrb[0].mxu0 %v633
        %v784 = vpop.f32.mrb[0].mxu0
        %v785 = vadd.f32 %v546, %v784
        %v786 = vpop.f32.mrb[0].mxu0
        %v787 = vadd.f32 %v546, %v786
        %788 = vmatprep.mubr.f32.mxu0 0.0
        %789 = vmatmul.mubr.f32.gmra.mrb[0].mxu0 %v636
        %v790 = vpop.f32.mrb[0].mxu0
        %v791 = vadd.f32 %v551, %v790
        %v792 = vpop.f32.mrb[0].mxu0
        %v793 = vadd.f32 %v551, %v792
        %794 = vmatprep.mubr.f32.mxu0 0.0
        %795 = vmatmul.mubr.f32.gmra.mrb[0].mxu0 %v639
        %v796 = vpop.f32.mrb[0].mxu0
        %v797 = vadd.f32 %v556, %v796
        %v798 = vpop.f32.mrb[0].mxu0
        %v799 = vadd.f32 %v556, %v798
        %800 = vmatprep.mubr.f32.mxu0 0.0
        %801 = vmatmul.mubr.f32.gmra.mrb[0].mxu0 %v642
        %v802 = vpop.f32.mrb[0].mxu0
        %v803 = vadd.f32 %v561, %v802
        %v804 = vpop.f32.mrb[0].mxu0
        %v805 = vadd.f32 %v561, %v804
        %806 = vmatprep.mubr.f32.mxu0 0.0
        %807 = vmatmul.mubr.f32.gmra.mrb[0].mxu0 %v645
        %v808 = vpop.f32.mrb[0].mxu0
        %v809 = vadd.f32 %v566, %v808
        %v810 = vpop.f32.mrb[0].mxu0
        %v811 = vadd.f32 %v566, %v810
        %812 = vmatprep.mubr.f32.mxu0 0.0
        %813 = vmatmul.mubr.f32.gmra.mrb[0].mxu0 %v648
        %v814 = vpop.f32.mrb[0].mxu0
        %v815 = vadd.f32 %v571, %v814
        %v816 = vpop.f32.mrb[0].mxu0
        %v817 = vadd.f32 %v571, %v816
        %818 = vmatprep.mubr.f32.mxu0 0.0
        %819 = vmatmul.mubr.f32.gmra.mrb[0].mxu0 %v651
        %v820 = vpop.f32.mrb[0].mxu0
        %v821 = vadd.f32 %v576, %v820
        %v822 = vpop.f32.mrb[0].mxu0
        %v823 = vadd.f32 %v576, %v822
        %824 = vmatprep.mubr.f32.mxu0 0.0
        %825 = vmatmul.mubr.f32.gmra.mrb[0].mxu0 %v654
        %v826 = vpop.f32.mrb[0].mxu0
        %v827 = vadd.f32 %v581, %v826
        %v828 = vpop.f32.mrb[0].mxu0
        %v829 = vadd.f32 %v581, %v828
        %830 = vmatprep.mubr.f32.mxu0 0.0
        %831 = vmatmul.mubr.f32.gmra.mrb[0].mxu0 %v657
        %v832 = vpop.f32.mrb[0].mxu0
        %v833 = vadd.f32 %v586, %v832
        %v834 = vpop.f32.mrb[0].mxu0
        %v835 = vadd.f32 %v586, %v834
        %836 = vmatprep.mubr.f32.mxu0 0.0
        %837 = vmatmul.mubr.f32.gmra.mrb[0].mxu0 %v660
        %v838 = vpop.f32.mrb[0].mxu0
        %v839 = vadd.f32 %v591, %v838
        %v840 = vpop.f32.mrb[0].mxu0
        %v841 = vadd.f32 %v591, %v840
        %842 = vmatprep.mubr.f32.mxu0 0.0
        %843 = vmatmul.mubr.f32.gmra.mrb[0].mxu0 %v663
        %v844 = vpop.f32.mrb[0].mxu0
        %v845 = vadd.f32 %v596, %v844
        %v846 = vpop.f32.mrb[0].mxu0
        %v847 = vadd.f32 %v596, %v846
        %848 = vmatprep.mubr.f32.mxu0 0.0
        %849 = vmatmul.mubr.f32.gmra.mrb[0].mxu0 %v666
        %v850 = vpop.f32.mrb[0].mxu0
        %v851 = vadd.f32 %v601, %v850
        %v852 = vpop.f32.mrb[0].mxu0
        %v853 = vadd.f32 %v601, %v852
        %854 = vmatprep.mubr.f32.mxu0 0.0
        %855 = vmatmul.mubr.f32.gmra.mrb[0].mxu0 %v669
        %v856 = vpop.f32.mrb[0].mxu0
        %v857 = vadd.f32 %v606, %v856
        %v858 = vpop.f32.mrb[0].mxu0
        %v859 = vadd.f32 %v606, %v858
        %860 = vdwg.mxu0
        %v862 = vlaneseq
        %v863 = vshrl.u32 %v862, 7
        %v864 = vsub.s32 0, %v863
        %v865 = vrot.slane %v507, %v864
        %v866 = vlaneseq
        %v867 = vshrl.u32 %v866, 7
        %v868 = vsub.s32 1, %v867
        %v869 = vrot.slane %v507, %v868
        %v872 = vadd.f32 %v743, %v865
        %v873 = vadd.f32 %v745, %v869
        %v874 = vadd.f32 %v749, %v865
        %v875 = vadd.f32 %v751, %v869
        %v876 = vadd.f32 %v755, %v865
        %v877 = vadd.f32 %v757, %v869
        %v878 = vadd.f32 %v761, %v865
        %v879 = vadd.f32 %v763, %v869
        %v880 = vadd.f32 %v767, %v865
        %v881 = vadd.f32 %v769, %v869
        %v882 = vadd.f32 %v773, %v865
        %v883 = vadd.f32 %v775, %v869
        %v884 = vadd.f32 %v779, %v865
        %v885 = vadd.f32 %v781, %v869
        %v886 = vadd.f32 %v785, %v865
        %v887 = vadd.f32 %v787, %v869
        %v888 = vadd.f32 %v791, %v865
        %v889 = vadd.f32 %v793, %v869
        %v890 = vadd.f32 %v797, %v865
        %v891 = vadd.f32 %v799, %v869
        %v892 = vadd.f32 %v803, %v865
        %v893 = vadd.f32 %v805, %v869
        %v894 = vadd.f32 %v809, %v865
        %v895 = vadd.f32 %v811, %v869
        %v896 = vadd.f32 %v815, %v865
        %v897 = vadd.f32 %v817, %v869
        %v898 = vadd.f32 %v821, %v865
        %v899 = vadd.f32 %v823, %v869
        %v900 = vadd.f32 %v827, %v865
        %v901 = vadd.f32 %v829, %v869
        %v902 = vadd.f32 %v833, %v865
        %v903 = vadd.f32 %v835, %v869
        %v904 = vadd.f32 %v839, %v865
        %v905 = vadd.f32 %v841, %v869
        %v906 = vadd.f32 %v845, %v865
        %v907 = vadd.f32 %v847, %v869
        %v908 = vadd.f32 %v851, %v865
        %v909 = vadd.f32 %v853, %v869
        %v910 = vadd.f32 %v857, %v865
        %v911 = vadd.f32 %v859, %v869
        %v912 = vmin.f32 %v872, %v876
        %v913 = vmin.f32 %v874, %v878
        %v914 = vmin.f32 %v912, %v880
        %v915 = vmin.f32 %v913, %v882
        %v916 = vmin.f32 %v914, %v884
        %v917 = vmin.f32 %v915, %v886
        %v918 = vmin.f32 %v916, %v888
        %v919 = vmin.f32 %v917, %v890
        %v920 = vmin.f32 %v918, %v892
        %v921 = vmin.f32 %v919, %v894
        %v922 = vmin.f32 %v920, %v896
        %v923 = vmin.f32 %v921, %v898
        %v924 = vmin.f32 %v922, %v900
        %v925 = vmin.f32 %v923, %v902
        %v926 = vmin.f32 %v924, %v904
        %v927 = vmin.f32 %v925, %v906
        %v928 = vmin.f32 %v926, %v908
        %v929 = vmin.f32 %v927, %v910
        %v930 = vmin.f32 %v928, %v929
        %v931 = vrot.slane %v930, 4
        %v932 = vmin.f32 %v930, %v931
        %v933 = vrot.slane %v932, 2
        %v934 = vmin.f32 %v932, %v933
        %v935 = vrot.slane %v934, 1
        %v936 = vmin.f32 %v934, %v935
        %v937 = vmin.f32 %v873, %v877
        %v938 = vmin.f32 %v875, %v879
        %v939 = vmin.f32 %v937, %v881
        %v940 = vmin.f32 %v938, %v883
        %v941 = vmin.f32 %v939, %v885
        %v942 = vmin.f32 %v940, %v887
        %v943 = vmin.f32 %v941, %v889
        %v944 = vmin.f32 %v942, %v891
        %v945 = vmin.f32 %v943, %v893
        %v946 = vmin.f32 %v944, %v895
        %v947 = vmin.f32 %v945, %v897
        %v948 = vmin.f32 %v946, %v899
        %v949 = vmin.f32 %v947, %v901
        %v950 = vmin.f32 %v948, %v903
        %v951 = vmin.f32 %v949, %v905
        %v952 = vmin.f32 %v950, %v907
        %v953 = vmin.f32 %v951, %v909
        %v954 = vmin.f32 %v952, %v911
        %v955 = vmin.f32 %v953, %v954
        %v956 = vrot.slane %v955, 4
        %v957 = vmin.f32 %v955, %v956
        %v958 = vrot.slane %v957, 2
        %v959 = vmin.f32 %v957, %v958
        %v960 = vrot.slane %v959, 1
        %v961 = vmin.f32 %v959, %v960
        %v962 = vmax.f32 %v936, 0.0
        %v963 = vmax.f32 %v961, 0.0
        %v966 = vcombine.low %v962, %v963
        %v968 = vunpack.c.l.s4 1966171168
        %v969 = vunpack.c.0.s8 %v968
        %v970 = vlaneseq
        %v971 = vshrl.u32 %v970, 7
        %v972 = vsub.s32 %v969, %v971
        %v973 = vrot.slane %v966, %v972
        %v975 = vunpack.c.l.s4 1966171168
        %v976 = vunpack.c.0.s8 %v975
        %v977 = vlaneseq
        %v978 = vshrl.u32 %v977, 7
        %v979 = vsub.s32 %v976, %v978
        %v980 = vrot.slane %v973, %v979
        %v982 = vlaneseq
        %vm983 = vcmp.ge.s32.totalorder %v982, 0
        %vm984 = vcmp.lt.s32.totalorder %v982, 256
        %vm985 = vmand %vm983, %vm984
        %986 = vst.msk [vmem:[%s287] sm:$0x3] %vm985, %v980
        %v987 = vmin.f32 %v872, %v873
        %v988 = vmin.f32 %v874, %v875
        %v989 = vmin.f32 %v876, %v877
        %v990 = vmin.f32 %v878, %v879
        %v991 = vmin.f32 %v880, %v881
        %v992 = vmin.f32 %v882, %v883
        %v993 = vmin.f32 %v884, %v885
        %v994 = vmin.f32 %v886, %v887
        %v995 = vmin.f32 %v888, %v889
        %v996 = vmin.f32 %v890, %v891
        %v997 = vmin.f32 %v892, %v893
        %v998 = vmin.f32 %v894, %v895
        %v999 = vmin.f32 %v896, %v897
        %v1000 = vmin.f32 %v898, %v899
        %v1001 = vmin.f32 %v900, %v901
        %v1002 = vmin.f32 %v902, %v903
        %v1003 = vmin.f32 %v904, %v905
        %v1004 = vmin.f32 %v906, %v907
        %v1005 = vmin.f32 %v908, %v909
        %v1006 = vmin.f32 %v910, %v911
        %v1007 = vld [vmem:[#allocation3] sm:$0xff]
        %v1008 = vld [vmem:[#allocation3 + $0x8] sm:$0xff]
        %v1009 = vld [vmem:[#allocation3 + $0x10] sm:$0xff]
        %v1010 = vld [vmem:[#allocation3 + $0x18] sm:$0xff]
        %v1011 = vld [vmem:[#allocation3 + $0x20] sm:$0xff]
        %v1012 = vld [vmem:[#allocation3 + $0x28] sm:$0xff]
        %v1013 = vld [vmem:[#allocation3 + $0x30] sm:$0xff]
        %v1014 = vld [vmem:[#allocation3 + $0x38] sm:$0xff]
        %v1015 = vld [vmem:[#allocation3 + $0x40] sm:$0xff]
        %v1016 = vld [vmem:[#allocation3 + $0x48] sm:$0xff]
        %v1017 = vld [vmem:[#allocation3 + $0x50] sm:$0xff]
        %v1018 = vld [vmem:[#allocation3 + $0x58] sm:$0xff]
        %v1019 = vld [vmem:[#allocation3 + $0x60] sm:$0xff]
        %v1020 = vld [vmem:[#allocation3 + $0x68] sm:$0xff]
        %v1021 = vld [vmem:[#allocation3 + $0x70] sm:$0xff]
        %v1022 = vld [vmem:[#allocation3 + $0x78] sm:$0xff]
        %v1023 = vld [vmem:[#allocation3 + $0x80] sm:$0xff]
        %v1024 = vld [vmem:[#allocation3 + $0x88] sm:$0xff]
        %v1025 = vld [vmem:[#allocation3 + $0x90] sm:$0xff]
        %v1026 = vld [vmem:[#allocation3 + $0x98] sm:$0xff]
        %v1027 = vmin.f32 %v1007, %v987
        %v1028 = vmin.f32 %v1008, %v988
        %v1029 = vmin.f32 %v1009, %v989
        %v1030 = vmin.f32 %v1010, %v990
        %v1031 = vmin.f32 %v1011, %v991
        %v1032 = vmin.f32 %v1012, %v992
        %v1033 = vmin.f32 %v1013, %v993
        %v1034 = vmin.f32 %v1014, %v994
        %v1035 = vmin.f32 %v1015, %v995
        %v1036 = vmin.f32 %v1016, %v996
        %v1037 = vmin.f32 %v1017, %v997
        %v1038 = vmin.f32 %v1018, %v998
        %v1039 = vmin.f32 %v1019, %v999
        %v1040 = vmin.f32 %v1020, %v1000
        %v1041 = vmin.f32 %v1021, %v1001
        %v1042 = vmin.f32 %v1022, %v1002
        %v1043 = vmin.f32 %v1023, %v1003
        %v1044 = vmin.f32 %v1024, %v1004
        %v1045 = vmin.f32 %v1025, %v1005
        %v1046 = vmin.f32 %v1026, %v1006
        %1047 = vst [vmem:[#allocation3] sm:$0xff] %v1027
        %1048 = vst [vmem:[#allocation3 + $0x8] sm:$0xff] %v1028
        %1049 = vst [vmem:[#allocation3 + $0x10] sm:$0xff] %v1029
        %1050 = vst [vmem:[#allocation3 + $0x18] sm:$0xff] %v1030
        %1051 = vst [vmem:[#allocation3 + $0x20] sm:$0xff] %v1031
        %1052 = vst [vmem:[#allocation3 + $0x28] sm:$0xff] %v1032
        %1053 = vst [vmem:[#allocation3 + $0x30] sm:$0xff] %v1033
        %1054 = vst [vmem:[#allocation3 + $0x38] sm:$0xff] %v1034
        %1055 = vst [vmem:[#allocation3 + $0x40] sm:$0xff] %v1035
        %1056 = vst [vmem:[#allocation3 + $0x48] sm:$0xff] %v1036
        %1057 = vst [vmem:[#allocation3 + $0x50] sm:$0xff] %v1037
        %1058 = vst [vmem:[#allocation3 + $0x58] sm:$0xff] %v1038
        %1059 = vst [vmem:[#allocation3 + $0x60] sm:$0xff] %v1039
        %1060 = vst [vmem:[#allocation3 + $0x68] sm:$0xff] %v1040
        %1061 = vst [vmem:[#allocation3 + $0x70] sm:$0xff] %v1041
        %1062 = vst [vmem:[#allocation3 + $0x78] sm:$0xff] %v1042
        %1063 = vst [vmem:[#allocation3 + $0x80] sm:$0xff] %v1043
        %1064 = vst [vmem:[#allocation3 + $0x88] sm:$0xff] %v1044
        %1065 = vst [vmem:[#allocation3 + $0x90] sm:$0xff] %v1045
        %1066 = vst [vmem:[#allocation3 + $0x98] sm:$0xff] %v1046
        // Predicated region
        $region37: #{tpu_custom_call.1} parent=31 // pred_check
          %p1067 = pneg %p320
        $region38: #{tpu_custom_call.1} parent=31 // pred_check_branch
          %1069 = sbr.rel (%p1067) target = $region40
        $region39: #{tpu_custom_call.1} parent=31 // pred_region
          %v1070 = vld [vmem:[#allocation3] sm:$0xff]
          %v1071 = vld [vmem:[#allocation3 + $0x8] sm:$0xff]
          %v1072 = vld [vmem:[#allocation3 + $0x10] sm:$0xff]
          %v1073 = vld [vmem:[#allocation3 + $0x18] sm:$0xff]
          %v1074 = vld [vmem:[#allocation3 + $0x20] sm:$0xff]
          %v1075 = vld [vmem:[#allocation3 + $0x28] sm:$0xff]
          %v1076 = vld [vmem:[#allocation3 + $0x30] sm:$0xff]
          %v1077 = vld [vmem:[#allocation3 + $0x38] sm:$0xff]
          %v1078 = vld [vmem:[#allocation3 + $0x40] sm:$0xff]
          %v1079 = vld [vmem:[#allocation3 + $0x48] sm:$0xff]
          %v1080 = vld [vmem:[#allocation3 + $0x50] sm:$0xff]
          %v1081 = vld [vmem:[#allocation3 + $0x58] sm:$0xff]
          %v1082 = vld [vmem:[#allocation3 + $0x60] sm:$0xff]
          %v1083 = vld [vmem:[#allocation3 + $0x68] sm:$0xff]
          %v1084 = vld [vmem:[#allocation3 + $0x70] sm:$0xff]
          %v1085 = vld [vmem:[#allocation3 + $0x78] sm:$0xff]
          %v1086 = vld [vmem:[#allocation3 + $0x80] sm:$0xff]
          %v1087 = vld [vmem:[#allocation3 + $0x88] sm:$0xff]
          %v1088 = vld [vmem:[#allocation3 + $0x90] sm:$0xff]
          %v1089 = vld [vmem:[#allocation3 + $0x98] sm:$0xff]
          %1090 = vmin.xlane.f32.xlu0 %v1070
          %v1091 = vpop.xlane.xlu0 %1090
          %1092 = vmin.xlane.f32.xlu0 %v1071
          %v1093 = vpop.xlane.xlu0 %1092
          %1094 = vmin.xlane.f32.xlu0 %v1072
          %v1095 = vpop.xlane.xlu0 %1094
          %1096 = vmin.xlane.f32.xlu0 %v1073
          %v1097 = vpop.xlane.xlu0 %1096
          %1098 = vmin.xlane.f32.xlu0 %v1074
          %v1099 = vpop.xlane.xlu0 %1098
          %1100 = vmin.xlane.f32.xlu0 %v1075
          %v1101 = vpop.xlane.xlu0 %1100
          %1102 = vmin.xlane.f32.xlu0 %v1076
          %v1103 = vpop.xlane.xlu0 %1102
          %1104 = vmin.xlane.f32.xlu0 %v1077
          %v1105 = vpop.xlane.xlu0 %1104
          %1106 = vmin.xlane.f32.xlu0 %v1078
          %v1107 = vpop.xlane.xlu0 %1106
          %1108 = vmin.xlane.f32.xlu0 %v1079
          %v1109 = vpop.xlane.xlu0 %1108
          %1110 = vmin.xlane.f32.xlu0 %v1080
          %v1111 = vpop.xlane.xlu0 %1110
          %1112 = vmin.xlane.f32.xlu0 %v1081
          %v1113 = vpop.xlane.xlu0 %1112
          %1114 = vmin.xlane.f32.xlu0 %v1082
          %v1115 = vpop.xlane.xlu0 %1114
          %1116 = vmin.xlane.f32.xlu0 %v1083
          %v1117 = vpop.xlane.xlu0 %1116
          %1118 = vmin.xlane.f32.xlu0 %v1084
          %v1119 = vpop.xlane.xlu0 %1118
          %1120 = vmin.xlane.f32.xlu0 %v1085
          %v1121 = vpop.xlane.xlu0 %1120
          %1122 = vmin.xlane.f32.xlu0 %v1086
          %v1123 = vpop.xlane.xlu0 %1122
          %1124 = vmin.xlane.f32.xlu0 %v1087
          %v1125 = vpop.xlane.xlu0 %1124
          %1126 = vmin.xlane.f32.xlu0 %v1088
          %v1127 = vpop.xlane.xlu0 %1126
          %1128 = vmin.xlane.f32.xlu0 %v1089
          %v1129 = vpop.xlane.xlu0 %1128
          %v1130 = vmax.f32 %v1091, 0.0
          %v1131 = vmax.f32 %v1093, 0.0
          %v1132 = vmax.f32 %v1095, 0.0
          %v1133 = vmax.f32 %v1097, 0.0
          %v1134 = vmax.f32 %v1099, 0.0
          %v1135 = vmax.f32 %v1101, 0.0
          %v1136 = vmax.f32 %v1103, 0.0
          %v1137 = vmax.f32 %v1105, 0.0
          %v1138 = vmax.f32 %v1107, 0.0
          %v1139 = vmax.f32 %v1109, 0.0
          %v1140 = vmax.f32 %v1111, 0.0
          %v1141 = vmax.f32 %v1113, 0.0
          %v1142 = vmax.f32 %v1115, 0.0
          %v1143 = vmax.f32 %v1117, 0.0
          %v1144 = vmax.f32 %v1119, 0.0
          %v1145 = vmax.f32 %v1121, 0.0
          %v1146 = vmax.f32 %v1123, 0.0
          %v1147 = vmax.f32 %v1125, 0.0
          %v1148 = vmax.f32 %v1127, 0.0
          %v1149 = vmax.f32 %v1129, 0.0
          %1150 = vxpose.xlu0.b32.start [1/16] %v1130, 128
          %1151 = vxpose.xlu0.b32.cont [2/16] %v1131, 128
          %1152 = vxpose.xlu0.b32.cont [3/16] %v1132, 128
          %1153 = vxpose.xlu0.b32.cont [4/16] %v1133, 128
          %1154 = vxpose.xlu0.b32.cont [5/16] %v1134, 128
          %1155 = vxpose.xlu0.b32.cont [6/16] %v1135, 128
          %1156 = vxpose.xlu0.b32.cont [7/16] %v1136, 128
          %1157 = vxpose.xlu0.b32.cont [8/16] %v1137, 128
          %1158 = vxpose.xlu0.b32.cont [9/16] %v1138, 128
          %1159 = vxpose.xlu0.b32.cont [10/16] %v1139, 128
          %1160 = vxpose.xlu0.b32.cont [11/16] %v1140, 128
          %1161 = vxpose.xlu0.b32.cont [12/16] %v1141, 128
          %1162 = vxpose.xlu0.b32.cont [13/16] %v1142, 128
          %1163 = vxpose.xlu0.b32.cont [14/16] %v1143, 128
          %1164 = vxpose.xlu0.b32.cont [15/16] %v1144, 128
          %1165 = vxpose.xlu0.b32.end [16/16] %v1145, 128
          %v1166 = vpop.trf.xlu0
          %v1167 = vpop.trf.xlu0
          %v1168 = vpop.trf.xlu0
          %v1169 = vpop.trf.xlu0
          %v1170 = vpop.trf.xlu0
          %v1171 = vpop.trf.xlu0
          %v1172 = vpop.trf.xlu0
          %v1173 = vpop.trf.xlu0
          %v1174 = vpop.trf.xlu0
          %v1175 = vpop.trf.xlu0
          %v1176 = vpop.trf.xlu0
          %v1177 = vpop.trf.xlu0
          %v1178 = vpop.trf.xlu0
          %v1179 = vpop.trf.xlu0
          %v1180 = vpop.trf.xlu0
          %v1181 = vpop.trf.xlu0
          %1182 = vxpose.xlu0.b32.start [1/16] %v1146, 128
          %1183 = vxpose.xlu0.b32.cont [2/16] %v1147, 128
          %1184 = vxpose.xlu0.b32.cont [3/16] %v1148, 128
          %1185 = vxpose.xlu0.b32.cont [4/16] %v1149, 128
          %1186 = vxpose.xlu0.b32.cont [5/16] 0.0, 128
          %1187 = vxpose.xlu0.b32.cont [6/16] 0.0, 128
          %1188 = vxpose.xlu0.b32.cont [7/16] 0.0, 128
          %1189 = vxpose.xlu0.b32.cont [8/16] 0.0, 128
          %1190 = vxpose.xlu0.b32.cont [9/16] 0.0, 128
          %1191 = vxpose.xlu0.b32.cont [10/16] 0.0, 128
          %1192 = vxpose.xlu0.b32.cont [11/16] 0.0, 128
          %1193 = vxpose.xlu0.b32.cont [12/16] 0.0, 128
          %1194 = vxpose.xlu0.b32.cont [13/16] 0.0, 128
          %1195 = vxpose.xlu0.b32.cont [14/16] 0.0, 128
          %1196 = vxpose.xlu0.b32.cont [15/16] 0.0, 128
          %1197 = vxpose.xlu0.b32.end [16/16] 0.0, 128
          %v1198 = vpop.trf.xlu0
          %v1199 = vpop.trf.xlu0
          %v1200 = vpop.trf.xlu0
          %v1201 = vpop.trf.xlu0
          %v1202 = vpop.trf.xlu0
          %v1203 = vpop.trf.xlu0
          %v1204 = vpop.trf.xlu0
          %v1205 = vpop.trf.xlu0
          %v1206 = vpop.trf.xlu0
          %v1207 = vpop.trf.xlu0
          %v1208 = vpop.trf.xlu0
          %v1209 = vpop.trf.xlu0
          %v1210 = vpop.trf.xlu0
          %v1211 = vpop.trf.xlu0
          %v1212 = vpop.trf.xlu0
          %v1213 = vpop.trf.xlu0
          %v1216 = vcombine.low %v1166, %v1198
          %v1218 = vunpack.c.l.s4 1966171168
          %v1219 = vunpack.c.0.s8 %v1218
          %v1220 = vlaneseq
          %v1221 = vshrl.u32 %v1220, 7
          %v1222 = vsub.s32 %v1219, %v1221
          %v1223 = vrot.slane %v1216, %v1222
          %v1225 = vunpack.c.l.s4 1966171168
          %v1226 = vunpack.c.0.s8 %v1225
          %v1227 = vlaneseq
          %v1228 = vshrl.u32 %v1227, 7
          %v1229 = vsub.s32 %v1226, %v1228
          %v1230 = vrot.slane %v1223, %v1229
          %vm1232 = vcmp.lt.s32.totalorder %v982, 160
          %vm1233 = vmand %vm983, %vm1232
          %1234 = vst.msk [vmem:[%s280] sm:$0x3] %vm1233, %v1230
        $region40: #{tpu_custom_call.1} parent=31 // pred_fallthru
          _
        %s1235 = sand.u32 %s135, 1
        %s1236 = scalar_lea.sflag [#allocation5], %s1235
        %s1237 = sand.u32 %s135, 1
        %s1238 = smul.addr %s1237, 2
        %s1239 = scalar_lea.vmem [#allocation4], %s1238
        %s1240 = sand.u32 %s165, 1
        %s1241 = scalar_lea.sflag [#allocation7], %s1240
        %s1242 = sand.u32 %s165, 1
        %s1243 = smul.addr %s1242, 2
        %s1244 = scalar_lea.vmem [#allocation6], %s1243
        // Predicated region
        $region41: #{tpu_custom_call.1} parent=31 // pred_check
          %p1245 = pneg %p145
        $region42: #{tpu_custom_call.1} parent=31 // pred_check_branch
          %1247 = sbr.rel (%p1245) target = $region44
        $region43: #{tpu_custom_call.1} parent=31 // pred_region
          %s1248 = smul.u32 2, %s28
          %s1250 = ssub.s32 32, 32
          %1251 = vsyncadd %s1236, %s1250
          %s1252 = smul.addr %s27, 2
          %s1253 = sadd.s32 %s1248, %s1252
          %s1254 = smul.addr %s1253, 16
          %s1255 = scalar_lea.hbm %s3, %s1254
          %s1257 = sshll.u32 %s1239, 4
          %s1258 = int_to_ptr.vmem [resolvable:$true] %s1257
          %1260 = dma.vmem_to_hbm [thread:$0]  %s1258, 32, %s1255, %s1236
        $region44: #{tpu_custom_call.1} parent=31 // pred_fallthru
          _
        // Predicated region
        $region45: #{tpu_custom_call.1} parent=31 // pred_check
          %p1261 = pneg %p175
        $region46: #{tpu_custom_call.1} parent=31 // pred_check_branch
          %1263 = sbr.rel (%p1261) target = $region48
        $region47: #{tpu_custom_call.1} parent=31 // pred_region
          %s1264 = sadd.s32 %s27, %s28
          %s1265 = smul.u32 2, %s29
          %s1267 = ssub.s32 32, 32
          %1268 = vsyncadd %s1241, %s1267
          %s1269 = smul.addr %s1264, 2
          %s1270 = sadd.s32 %s1265, %s1269
          %s1271 = smul.addr %s1270, 16
          %s1272 = scalar_lea.hbm %s4, %s1271
          %s1274 = sshll.u32 %s1244, 4
          %s1275 = int_to_ptr.vmem [resolvable:$true] %s1274
          %1277 = dma.vmem_to_hbm [thread:$0]  %s1275, 32, %s1272, %s1241
        $region48: #{tpu_custom_call.1} parent=31 // pred_fallthru
          _
      $region32: #{tpu_custom_call.1} parent=5 // pred_fallthru
        _
      %p1278 = scmp.le.s32.totalorder 2, %s17
      // Predicated region
      $region49: #{tpu_custom_call.1} parent=5 // pred_check
        %p1279 = pneg %p1278
      $region50: #{tpu_custom_call.1} parent=5 // pred_check_branch
        %1281 = sbr.rel (%p1279) target = $region52
      $region51: #{tpu_custom_call.1} parent=5 // pred_region
        %s1282 = ssub.s32 %s17, 2
        // Predicated region
        $region53: #{tpu_custom_call.1} parent=51 // pred_check
          %p1283 = pneg %p151
        $region54: #{tpu_custom_call.1} parent=51 // pred_check_branch
          %1285 = sbr.rel (%p1283) target = $region56
        $region55: #{tpu_custom_call.1} parent=51 // pred_region
          %s1286 = sand.u32 %s136, 1
          %s1287 = scalar_lea.sflag [#allocation5], %s1286
          %s1288 = sand.u32 %s136, 1
          %s1289 = smul.addr %s1288, 2
          %s1290 = scalar_lea.vmem [#allocation4], %s1289
          %1291 = dma.done %s1287, 32
        $region56: #{tpu_custom_call.1} parent=51 // pred_fallthru
          _
        // Predicated region
        $region57: #{tpu_custom_call.1} parent=51 // pred_check
          %p1292 = pneg %p181
        $region58: #{tpu_custom_call.1} parent=51 // pred_check_branch
          %1294 = sbr.rel (%p1292) target = $region60
        $region59: #{tpu_custom_call.1} parent=51 // pred_region
          %s1295 = sand.u32 %s166, 1
          %s1296 = scalar_lea.sflag [#allocation7], %s1295
          %s1297 = sand.u32 %s166, 1
          %s1298 = smul.addr %s1297, 2
          %s1299 = scalar_lea.vmem [#allocation6], %s1298
          %1300 = dma.done %s1296, 32
        $region60: #{tpu_custom_call.1} parent=51 // pred_fallthru
          _
      $region52: #{tpu_custom_call.1} parent=5 // pred_fallthru
        _
    $region6: #{tpu_custom_call.1} parent=1 // loop_footer
      %s21 = sadd.s32 1, %s17
    $region7: #{tpu_custom_call.1} parent=1 // loop_footer_branch
      %16 = sbr.rel target = $region3
    $region8: #{tpu_custom_call.1} parent=1 // loop_exit
      _
    %1301 = vsyncpa [#allocation5], 1
    %s1302 = scalar_lea.sflag [#allocation5], 1
    %1303 = vsyncpa %s1302, 1
    %1304 = vsyncpa [#allocation7], 1
    %s1305 = scalar_lea.sflag [#allocation7], 1
    %1306 = vsyncpa %s1305, 1

</llo_original>
